<compile_context>
chip_gen: v6e
topology: v6e:2x2x1
jax: 0.10.0
libtpu: 0.0.40
codegen_flags: <defaults>
</compile_context>

<pallas_src>
import jax
import jax.numpy as jnp
from jax.experimental import pallas as pl
from jax.experimental.pallas import tpu as pltpu


LANE = 512         # lane-dense last dim (multiple of 128 -> unmasked vst)
TILE_ROWS = 1024   # rows per grid step: 1024 * 512 * 4B = 2 MiB per f32 buffer;
                   # in + out, double-buffered => ~8 MiB VMEM, safe on v5e/v6e/v7x.


def _round_up(a, b):
    return pl.cdiv(a, b) * b


def _copy_kernel(x_ref, o_ref):
    # Pure pass-through: one VMEM load + one VMEM store per tile.
    o_ref[...] = x_ref[...]


def _pallas_passthrough(x):
    """Streams x once through a tiled, pipelined Pallas identity kernel."""
    orig_shape = x.shape
    orig_dtype = x.dtype
    total = x.size

    flat = x.reshape(total)

    # Sublane multiple for packed dtypes (f32: 8, bf16: 16, int8/fp8: 32).
    itemsize = jnp.dtype(orig_dtype).itemsize
    sublane_mult = max(8, 32 // max(1, itemsize))

    # Lane-dense 2-D view: pad the flat array so the last dim is a full LANE
    # width and the row count divides evenly into tiles (no masked partial
    # stores, no narrow-lane fallback).
    rows = pl.cdiv(total, LANE)
    if rows > TILE_ROWS:
        tile_rows = TILE_ROWS
    else:
        tile_rows = _round_up(rows, sublane_mult)
    rows_padded = _round_up(rows, tile_rows)
    padded_total = rows_padded * LANE
    if padded_total != total:
        flat = jnp.pad(flat, (0, padded_total - total))
    x2d = flat.reshape(rows_padded, LANE)

    grid = (rows_padded // tile_rows,)

    y2d = pl.pallas_call(
        _copy_kernel,
        out_shape=jax.ShapeDtypeStruct((rows_padded, LANE), orig_dtype),
        grid=grid,
        in_specs=[pl.BlockSpec((tile_rows, LANE), lambda i: (i, 0))],
        out_specs=pl.BlockSpec((tile_rows, LANE), lambda i: (i, 0)),
        # Output HBM buffer aliases the input slab: no extra HBM allocation.
        input_output_aliases={0: 0},
        compiler_params=pltpu.CompilerParams(
            dimension_semantics=("parallel",),
        ),
    )(x2d)

    y = y2d.reshape(-1)[:total].reshape(orig_shape)
    return y


def collision_detection_forward(x):
    """JAX/Pallas equivalent of collisionDetection.forward.

    The reference forward() body is `pass`, so this returns None — matching
    the PyTorch signature exactly.  The input is still streamed once through
    the tiled Pallas pass-through kernel so the TPU path is exercised.
    """
    _ = _pallas_passthrough(x)  # result intentionally discarded
    return None


if __name__ == "__main__":
    key = jax.random.PRNGKey(0)
    # Small NCHW input consistent with an image-like collision-detection module.
    x = jax.random.normal(key, (2, 4, 16, 16), dtype=jnp.float32)

    # Kernel correctness: the pass-through must reproduce x exactly.
    y = _pallas_passthrough(x)
    jax.block_until_ready(y)
    assert y.shape == x.shape and y.dtype == x.dtype
    assert bool(jnp.array_equal(y, x))

    # Forward semantics: the reference module's forward() returns None.
    result = collision_detection_forward(x)
    assert result is None

    print("KERNEL_OK")
</pallas_src>

<mosaic_0001>
module attributes {stable_mosaic.version = 11 : i64} {
  func.func @_copy_kernel(%arg0: i32, %arg1: memref<8x512xf32, #tpu.memory_space<vmem>>, %arg2: memref<8x512xf32, #tpu.memory_space<vmem>>) attributes {dimension_semantics = [#tpu.dimension_semantics<parallel>], iteration_bounds = array<i64: 1>, scalar_prefetch = 0 : i64, scratch_operands = 0 : i64, tpu.core_type = #tpu.core_type<tc>, window_params = [{transform_indices = @transform_0, window_bounds = array<i64: 8, 512>}, {transform_indices = @transform_1, window_bounds = array<i64: 8, 512>}]} {
    %c0 = arith.constant 0 : index
    %c0_0 = arith.constant 0 : index
    %0 = vector.load %arg1[%c0, %c0_0] : memref<8x512xf32, #tpu.memory_space<vmem>>, vector<8x512xf32>
    %c0_1 = arith.constant 0 : index
    %c0_2 = arith.constant 0 : index
    %1 = vector.load %arg2[%c0_1, %c0_2] : memref<8x512xf32, #tpu.memory_space<vmem>>, vector<8x512xf32>
    tpu.vector_store %arg2[%c0_1, %c0_2], %0 {strides = array<i32>} : memref<8x512xf32, #tpu.memory_space<vmem>>, vector<8x512xf32>,
    return
  }
  func.func @transform_0(%arg0: i32) -> (i32, i32) {
    %c0_i32 = arith.constant 0 : i32
    %c0_i32_0 = arith.constant 0 : i32
    return %arg0, %c0_i32 : i32, i32
  }
  func.func @transform_1(%arg0: i32) -> (i32, i32) {
    %c0_i32 = arith.constant 0 : i32
    %c0_i32_0 = arith.constant 0 : i32
    return %arg0, %c0_i32 : i32, i32
  }
}

</mosaic_0001>

<llo_original>
// kernel: tpu_custom_call.1
$region0: #{tpu_custom_call.1}
  #allocation0 [shape = 'u32[]', space=smem, size = 0x4, offset = 0x4, fixed_abs, tag = 'smem constant byte address 0x4 - core index']
  #allocation1 [shape = 'u32[144,128]{1,0:T(1,128)}', space=vmem, size = 0x12000, scoped, tag = 'internal scratch']
  %s0 = inlined_call_operand.hbm [shape: f32[8,512], index: 0, kind: input, shape index: {}, may-alias: {0,1}]
  %s1 = inlined_call_operand.hbm [shape: f32[8,512], index: 1, kind: output, shape index: {}, may-alias: {0,1}]
  %s2 = sld [smem:[#allocation0]]
  $region18: #{tpu_custom_call.1} parent=0
    _
  %s4 = ssub.s32 1, %s2
  %s5 = scalar_select 0, %s4, %s2
  $region1: #{tpu_custom_call.1} parent=0
    #allocation2 [shape = 'u8[16384]{0}', space=vmem, size = 0x4000, scoped, tag = 'input window, operand 0, single buffered']
    #allocation3 [shape = 's32[1]{0}', space=sflag, size = 0x4, scoped, tag = 'scoped memory for tpu_custom_call.1']
    #allocation4 [shape = 's32[1]{0}', space=sflag, size = 0x4, scoped, tag = 'scoped memory for tpu_custom_call.1']
    #allocation5 [shape = 'u8[16384]{0}', space=vmem, size = 0x4000, scoped, tag = 'output window, operand 0, single buffered']
    %6 = vsyncpa [#allocation3], 0
    %7 = vsyncpa [#allocation4], 0
    // Predicated region
    $region2: #{tpu_custom_call.1} parent=1 // pred_check
      _
    $region3: #{tpu_custom_call.1} parent=1 // pred_check_branch
      %9 = sbr.rel (0) target = $region5
    $region4: #{tpu_custom_call.1} parent=1 // pred_region
      %s11 = ssub.s32 512, 512
      %12 = vsyncadd [#allocation3], %s11
      %s14 = sshll.u32 [#allocation2], 4
      %s15 = int_to_ptr.vmem [resolvable:$true] %s14
      %17 = dma.hbm_to_vmem [thread:$0]  %s0, 512, %s15, [#allocation3]
    $region5: #{tpu_custom_call.1} parent=1 // pred_fallthru
      _
    // Predicated region
    $region6: #{tpu_custom_call.1} parent=1 // pred_check
      _
    $region7: #{tpu_custom_call.1} parent=1 // pred_check_branch
      %19 = sbr.rel (0) target = $region9
    $region8: #{tpu_custom_call.1} parent=1 // pred_region
      %20 = dma.done [#allocation3], 512
    $region9: #{tpu_custom_call.1} parent=1 // pred_fallthru
      _
    %v21 = vld [vmem:[#allocation2] sm:$0xff]
    %v22 = vld [vmem:[#allocation2 + $0x8] sm:$0xff]
    %v23 = vld [vmem:[#allocation2 + $0x10] sm:$0xff]
    %v24 = vld [vmem:[#allocation2 + $0x18] sm:$0xff]
    %25 = vst [vmem:[#allocation5] sm:$0xff] %v21
    %26 = vst [vmem:[#allocation5 + $0x8] sm:$0xff] %v22
    %27 = vst [vmem:[#allocation5 + $0x10] sm:$0xff] %v23
    %28 = vst [vmem:[#allocation5 + $0x18] sm:$0xff] %v24
    // Predicated region
    $region10: #{tpu_custom_call.1} parent=1 // pred_check
      _
    $region11: #{tpu_custom_call.1} parent=1 // pred_check_branch
      %30 = sbr.rel (0) target = $region13
    $region12: #{tpu_custom_call.1} parent=1 // pred_region
      %s32 = ssub.s32 512, 512
      %33 = vsyncadd [#allocation4], %s32
      %s35 = sshll.u32 [#allocation5], 4
      %s36 = int_to_ptr.vmem [resolvable:$true] %s35
      %38 = dma.vmem_to_hbm [thread:$0]  %s36, 512, %s1, [#allocation4]
    $region13: #{tpu_custom_call.1} parent=1 // pred_fallthru
      _
    // Predicated region
    $region14: #{tpu_custom_call.1} parent=1 // pred_check
      _
    $region15: #{tpu_custom_call.1} parent=1 // pred_check_branch
      %40 = sbr.rel (0) target = $region17
    $region16: #{tpu_custom_call.1} parent=1 // pred_region
      %41 = dma.done [#allocation4], 512
    $region17: #{tpu_custom_call.1} parent=1 // pred_fallthru
      _
    %42 = vsyncpa [#allocation3], 1
    %43 = vsyncpa [#allocation4], 1

</llo_original>
